<compile_context>
chip_gen: v7x
topology: tpu7x:2x2x1
jax: 0.10.0
libtpu: 0.0.40
codegen_flags: <defaults>
</compile_context>

<pallas_src>
import functools

import jax
import jax.numpy as jnp
import numpy as np
from jax import lax
from jax.experimental import pallas as pl
from jax.experimental.pallas import tpu as pltpu


def _vmem_limit():
    """Generation-aware VMEM budget: ~3/4 of physical, capped at 96 MiB."""
    try:
        cap = pltpu.get_tpu_info().vmem_capacity_bytes
        return int(min(96 * 1024 * 1024, (3 * cap) // 4))
    except Exception:  # conservative fallback (safe on v5e/v6e/v7x)
        return 48 * 1024 * 1024


def _pick_tile(extent, preferred, align):
    """Largest tile <= preferred that divides `extent` and is a multiple of
    `align`; falls back to the full extent (always a legal block)."""
    if extent <= preferred:
        return extent
    t = (preferred // align) * align
    while t >= align:
        if extent % t == 0:
            return t
        t -= align
    return extent


def _pick_head_block(num_heads, head_dim):
    """Smallest head block that keeps the output tile lane-dense (multiple of
    128 lanes) and satisfies the (8, 128) tiling constraint; falls back to all
    heads per grid step (block == full extent is always legal)."""
    for hb in range(8, num_heads, 8):
        if num_heads % hb == 0 and (hb * head_dim) % 128 == 0:
            return hb
    return num_heads


# ---------------------------------------------------------------- kernels ----
def _linear_bias_kernel(x_ref, w_ref, b_ref, o_ref):
    # (tm, Cin)bf16 @ (Cin, tn)bf16 -> f32 acc, + f32 bias, fused.
    acc = jnp.dot(x_ref[...], w_ref[...], preferred_element_type=jnp.float32)
    o_ref[...] = (acc + b_ref[...]).astype(o_ref.dtype)


def _linear_nobias_kernel(x_ref, w_ref, o_ref):
    o_ref[...] = jnp.dot(x_ref[...], w_ref[...],
                         preferred_element_type=jnp.float32).astype(o_ref.dtype)


def _flash_attn_kernel(q_ref, k_ref, v_ref, o_ref, m_sc, l_sc, acc_sc, *,
                       scale, tk, num_kv):
    # q_ref : (tq, h_blk, D) bf16      -- one q tile of a head block
    # k_ref : (N,  h_blk, D) bf16      -- full sequence, VMEM-resident
    # v_ref : (N,  h_blk, D) bf16      -- full sequence, VMEM-resident
    # o_ref : (tq, h_blk * D)          -- lane-dense output tile
    # scratch (f32): m/l (h_blk, tq, 1), acc (h_blk, tq, D)
    h_blk, head_dim = q_ref.shape[1], q_ref.shape[2]

    m_sc[...] = jnp.full(m_sc.shape, -jnp.inf, jnp.float32)
    l_sc[...] = jnp.zeros(l_sc.shape, jnp.float32)
    acc_sc[...] = jnp.zeros(acc_sc.shape, jnp.float32)

    q = q_ref[...]                                      # (tq, h_blk, D) bf16

    @pl.loop(0, num_kv)
    def _(ki):
        start = pl.multiple_of(ki * tk, tk)
        k_blk = k_ref[pl.ds(start, tk)]                 # (tk, h_blk, D) bf16
        v_blk = v_ref[pl.ds(start, tk)]                 # (tk, h_blk, D) bf16
        for h in range(h_blk):                          # static unroll
            q_h = q[:, h, :]                            # (tq, D) bf16
            k_h = k_blk[:, h, :]                        # (tk, D) bf16
            v_h = v_blk[:, h, :]                        # (tk, D) bf16
            # q @ k^T via dot_general contracting last dims (no explicit .T),
            # softmax scale fused in-kernel, f32 accumulation.
            s = lax.dot_general(q_h, k_h, (((1,), (1,)), ((), ())),
                                preferred_element_type=jnp.float32) * scale
            m_prev = m_sc[h]                            # (tq, 1) f32
            m_new = jnp.maximum(m_prev, s.max(axis=-1, keepdims=True))
            alpha = jnp.exp(m_prev - m_new)
            p = jnp.exp(s - m_new)                      # (tq, tk) f32
            l_sc[h] = alpha * l_sc[h] + p.sum(axis=-1, keepdims=True)
            acc_sc[h] = alpha * acc_sc[h] + jnp.dot(
                p.astype(v_h.dtype), v_h, preferred_element_type=jnp.float32)
            m_sc[h] = m_new

    for h in range(h_blk):                              # static unroll
        inv_l = pl.reciprocal(l_sc[h], approx=True)     # EUP, not a VALU divide
        o_ref[:, h * head_dim:(h + 1) * head_dim] = (
            acc_sc[h] * inv_l).astype(o_ref.dtype)


# ----------------------------------------------------------- pallas wrappers -
def linear_pallas(x2d, w_t, bias=None, *, tile_rows=512, tile_cols=512,
                  out_dtype=jnp.bfloat16):
    """x2d (M, Cin) @ w_t (Cin, Cout) [+ bias (1, Cout) f32] -> (M, Cout)."""
    M, Cin = x2d.shape
    Cout = w_t.shape[1]
    tm = _pick_tile(M, tile_rows, 8)
    tn = _pick_tile(Cout, tile_cols, 128)

    x_spec = pl.BlockSpec((tm, Cin), lambda i, j: (i, 0))
    w_spec = pl.BlockSpec((Cin, tn), lambda i, j: (0, j))
    o_spec = pl.BlockSpec((tm, tn), lambda i, j: (i, j))
    if bias is None:           # skip the bias DMA + add entirely
        kernel, in_specs, args = _linear_nobias_kernel, [x_spec, w_spec], (x2d, w_t)
    else:
        b_spec = pl.BlockSpec((1, tn), lambda i, j: (0, j))
        kernel, in_specs, args = (_linear_bias_kernel,
                                  [x_spec, w_spec, b_spec], (x2d, w_t, bias))

    return pl.pallas_call(
        kernel,
        grid_spec=pltpu.PrefetchScalarGridSpec(
            num_scalar_prefetch=0,
            grid=(M // tm, Cout // tn),
            in_specs=in_specs,
            out_specs=o_spec,
        ),
        out_shape=jax.ShapeDtypeStruct((M, Cout), out_dtype),
        compiler_params=pltpu.CompilerParams(
            dimension_semantics=("parallel", "parallel"),
            vmem_limit_bytes=_vmem_limit(),
        ),
    )(*args)


def attention_core_pallas(qkv, scale, *, tile_q=128, tile_kv=256,
                          out_dtype=jnp.bfloat16):
    """qkv (B, N, 3, H, D) -> softmax(q k^T * scale) @ v, heads merged: (B, N, H*D)."""
    B, N, _, H, D = qkv.shape
    C = H * D
    h_blk = _pick_head_block(H, D)
    bs = h_blk * D
    tq = _pick_tile(N, tile_q, 8)
    tk = _pick_tile(N, tile_kv, 8)
    num_kv = N // tk

    kernel = functools.partial(_flash_attn_kernel, scale=scale, tk=tk,
                               num_kv=num_kv)

    # q/k/v read straight from the (B, N, 3, H, D) view (no XLA transposes).
    # K/V blocks span the whole sequence and ignore the q-tile axis, so they
    # stay VMEM-resident across q tiles of the same (batch, head block).
    q_spec = pl.BlockSpec((pl.Squeezed(), tq, pl.Squeezed(), h_blk, D),
                          lambda b, hb, qi: (b, qi, 0, hb, 0))
    k_spec = pl.BlockSpec((pl.Squeezed(), N, pl.Squeezed(), h_blk, D),
                          lambda b, hb, qi: (b, 0, 1, hb, 0))
    v_spec = pl.BlockSpec((pl.Squeezed(), N, pl.Squeezed(), h_blk, D),
                          lambda b, hb, qi: (b, 0, 2, hb, 0))
    o_spec = pl.BlockSpec((pl.Squeezed(), tq, bs),
                          lambda b, hb, qi: (b, qi, hb))

    return pl.pallas_call(
        kernel,
        grid_spec=pltpu.PrefetchScalarGridSpec(
            num_scalar_prefetch=0,
            grid=(B, H // h_blk, N // tq),
            in_specs=[q_spec, k_spec, v_spec],
            out_specs=o_spec,
            scratch_shapes=[
                pltpu.VMEM((h_blk, tq, 1), jnp.float32),   # running max
                pltpu.VMEM((h_blk, tq, 1), jnp.float32),   # running denom
                pltpu.VMEM((h_blk, tq, D), jnp.float32),   # output accumulator
            ],
        ),
        out_shape=jax.ShapeDtypeStruct((B, N, C), out_dtype),
        compiler_params=pltpu.CompilerParams(
            dimension_semantics=("parallel", "parallel", "parallel"),
            vmem_limit_bytes=_vmem_limit(),
        ),
    )(qkv, qkv, qkv)


# ------------------------------------------------------------------ forward --
def attention_forward(x, params, num_heads, qk_scale=None):
    B, N, C = x.shape
    H = num_heads
    D = C // H
    scale = float(qk_scale) if qk_scale is not None else float(D) ** (-0.5)
    M = B * N
    cdt = jnp.bfloat16                       # MXU-native compute dtype

    x2d = x.reshape(M, C).astype(cdt)

    # qkv = nn.Linear(C, 3C): torch weight (3C, C) -> matmul weight (C, 3C).
    w_qkv_t = jnp.transpose(params["w_qkv"]).astype(cdt)
    b_qkv = params.get("b_qkv")
    if b_qkv is not None:
        b_qkv = b_qkv.reshape(1, 3 * C).astype(jnp.float32)
    qkv2d = linear_pallas(x2d, w_qkv_t, b_qkv)               # (M, 3C) bf16

    # Free (contiguous) view; the flash kernel indexes q/k/v + head blocks
    # directly out of this layout.
    qkv = qkv2d.reshape(B, N, 3, H, D)
    o = attention_core_pallas(qkv, scale)                    # (B, N, C) bf16

    # proj = nn.Linear(C, C) with bias.
    w_proj_t = jnp.transpose(params["w_proj"]).astype(cdt)
    b_proj = params["b_proj"].reshape(1, C).astype(jnp.float32)
    out2d = linear_pallas(o.reshape(M, C), w_proj_t, b_proj)  # (M, C) bf16
    return out2d.reshape(B, N, C)


# ---------------------------------------------------------- pure-JAX reference
def _ref_forward(x, params, num_heads, qk_scale=None):
    B, N, C = x.shape
    H = num_heads
    D = C // H
    scale = qk_scale if qk_scale is not None else D ** (-0.5)
    qkv = jnp.einsum("bnc,oc->bno", x, params["w_qkv"])
    if params.get("b_qkv") is not None:
        qkv = qkv + params["b_qkv"]
    qkv = qkv.reshape(B, N, 3, H, D).transpose(2, 0, 3, 1, 4)
    q, k, v = qkv[0], qkv[1], qkv[2]
    attn = jnp.einsum("bhqd,bhkd->bhqk", q, k) * scale
    attn = jax.nn.softmax(attn, axis=-1)
    o = jnp.einsum("bhqk,bhkd->bhqd", attn, v)
    o = o.transpose(0, 2, 1, 3).reshape(B, N, C)
    return jnp.einsum("bnc,oc->bno", o, params["w_proj"]) + params["b_proj"]


# --------------------------------------------------------------------- main --
if __name__ == "__main__":
    B, N, C, H = 2, 8, 32, 4        # batch, seq, hidden, heads (head_dim = 8)

    key = jax.random.PRNGKey(0)
    k1, k2, k3, k4 = jax.random.split(key, 4)
    params = {
        "w_qkv": jax.random.normal(k1, (3 * C, C), jnp.float32) / np.sqrt(C),
        "b_qkv": None,              # qkv_bias=False (module default)
        "w_proj": jax.random.normal(k2, (C, C), jnp.float32) / np.sqrt(C),
        "b_proj": jax.random.normal(k3, (C,), jnp.float32) * 0.05,
    }
    x = jax.random.normal(k4, (B, N, C), jnp.float32)

    out = attention_forward(x, params, num_heads=H)
    out = jax.block_until_ready(out)

    ref = _ref_forward(x, params, num_heads=H)
    # bf16 data path (f32 accumulation) -> relaxed tolerance vs f32 reference.
    np.testing.assert_allclose(np.asarray(out.astype(jnp.float32)),
                               np.asarray(ref), atol=5e-2, rtol=5e-2)
    print("KERNEL_OK")
</pallas_src>

<mosaic_0001>
module attributes {stable_mosaic.version = 11 : i64} {
  func.func @_linear_nobias_kernel(%arg0: i32, %arg1: i32, %arg2: memref<16x32xbf16, #tpu.memory_space<vmem>>, %arg3: memref<32x96xbf16, #tpu.memory_space<vmem>>, %arg4: memref<16x96xbf16, #tpu.memory_space<vmem>>) attributes {dimension_semantics = [#tpu.dimension_semantics<parallel>, #tpu.dimension_semantics<parallel>], iteration_bounds = array<i64: 1, 1>, scalar_prefetch = 0 : i64, scratch_operands = 0 : i64, tpu.core_type = #tpu.core_type<tc>, window_params = [{transform_indices = @transform_0, window_bounds = array<i64: 16, 32>}, {transform_indices = @transform_1, window_bounds = array<i64: 32, 96>}, {transform_indices = @transform_2, window_bounds = array<i64: 16, 96>}]} {
    %c0 = arith.constant 0 : index
    %c0_0 = arith.constant 0 : index
    %0 = vector.load %arg2[%c0, %c0_0] : memref<16x32xbf16, #tpu.memory_space<vmem>>, vector<16x32xbf16>
    %c0_1 = arith.constant 0 : index
    %c0_2 = arith.constant 0 : index
    %1 = vector.load %arg3[%c0_1, %c0_2] : memref<32x96xbf16, #tpu.memory_space<vmem>>, vector<32x96xbf16>
    %cst = arith.constant dense<0.000000e+00> : vector<16x96xf32>
    %2 = tpu.matmul %0, %1, %cst {dimension_numbers = #tpu.dot_dimension_numbers<[1], [0], [0], [1], [0, 0, 1, 1], [], []>} : vector<16x32xbf16>, vector<32x96xbf16>, vector<16x96xf32> -> vector<16x96xf32>
    %3 = arith.truncf %2 : vector<16x96xf32> to vector<16x96xbf16>
    %c0_3 = arith.constant 0 : index
    %c0_4 = arith.constant 0 : index
    %4 = vector.load %arg4[%c0_3, %c0_4] : memref<16x96xbf16, #tpu.memory_space<vmem>>, vector<16x96xbf16>
    tpu.vector_store %arg4[%c0_3, %c0_4], %3 {strides = array<i32>} : memref<16x96xbf16, #tpu.memory_space<vmem>>, vector<16x96xbf16>,
    return
  }
  func.func @transform_0(%arg0: i32, %arg1: i32) -> (i32, i32) {
    %c0_i32 = arith.constant 0 : i32
    %c0_i32_0 = arith.constant 0 : i32
    return %arg0, %c0_i32 : i32, i32
  }
  func.func @transform_1(%arg0: i32, %arg1: i32) -> (i32, i32) {
    %c0_i32 = arith.constant 0 : i32
    %c0_i32_0 = arith.constant 0 : i32
    return %c0_i32, %arg1 : i32, i32
  }
  func.func @transform_2(%arg0: i32, %arg1: i32) -> (i32, i32) {
    %c0_i32 = arith.constant 0 : i32
    return %arg0, %arg1 : i32, i32
  }
}

</mosaic_0001>

<llo_original>
// kernel: tpu_custom_call.1
$region0: #{tpu_custom_call.1}
  #allocation0 [shape = 'u32[]', space=smem, size = 0x4, offset = 0x4, fixed_abs, tag = 'smem constant byte address 0x4 - core index']
  #allocation1 [shape = 'u32[144,128]{1,0:T(1,128)}', space=vmem, size = 0x12000, scoped, tag = 'internal scratch']
  %s0 = inlined_call_operand.hbm [shape: bf16[16,32], index: 0, kind: input, shape index: {}]
  %s1 = inlined_call_operand.hbm [shape: bf16[32,96], index: 1, kind: input, shape index: {}]
  %s2 = inlined_call_operand.hbm [shape: bf16[16,96], index: 2, kind: output, shape index: {}]
  %s3 = sld [smem:[#allocation0]]
  $region26: #{tpu_custom_call.1} parent=0
    _
  %s5 = ssub.s32 1, %s3
  %s6 = scalar_select 0, %s5, %s3
  $region1: #{tpu_custom_call.1} parent=0
    #allocation2 [shape = 'u8[4096]{0}', space=vmem, size = 0x1000, scoped, tag = 'input window, operand 0, single buffered']
    #allocation3 [shape = 's32[1]{0}', space=sflag, size = 0x4, scoped, tag = 'scoped memory for tpu_custom_call.1']
    #allocation4 [shape = 's32[1]{0}', space=sflag, size = 0x4, scoped, tag = 'scoped memory for tpu_custom_call.1']
    #allocation5 [shape = 'u8[8192]{0}', space=vmem, size = 0x2000, scoped, tag = 'input window, operand 1, single buffered']
    #allocation6 [shape = 's32[1]{0}', space=sflag, size = 0x4, scoped, tag = 'scoped memory for tpu_custom_call.1']
    #allocation7 [shape = 'u8[4096]{0}', space=vmem, size = 0x1000, scoped, tag = 'output window, operand 0, single buffered']
    %7 = vsyncpa [#allocation3], 0
    %8 = vsyncpa [#allocation6], 0
    %9 = vsyncpa [#allocation4], 0
    // Predicated region
    $region2: #{tpu_custom_call.1} parent=1 // pred_check
      _
    $region3: #{tpu_custom_call.1} parent=1 // pred_check_branch
      %11 = sbr.rel (0) target = $region5
    $region4: #{tpu_custom_call.1} parent=1 // pred_region
      %s13 = ssub.s32 128, 128
      %14 = vsyncadd [#allocation3], %s13
      %s15 = sshll.u32 [#allocation2], 4
      %s16 = int_to_ptr.vmem [resolvable:$true] %s15
      %21 = dma.hbm_to_vmem [thread:$0]  %s0, 128, %s16, [#allocation3], 64, 64, 4
    $region5: #{tpu_custom_call.1} parent=1 // pred_fallthru
      _
    // Predicated region
    $region6: #{tpu_custom_call.1} parent=1 // pred_check
      _
    $region7: #{tpu_custom_call.1} parent=1 // pred_check_branch
      %23 = sbr.rel (0) target = $region9
    $region8: #{tpu_custom_call.1} parent=1 // pred_region
      %s25 = ssub.s32 256, 256
      %26 = vsyncadd [#allocation6], %s25
      %s27 = sshll.u32 [#allocation5], 4
      %s28 = int_to_ptr.vmem [resolvable:$true] %s27
      %33 = dma.hbm_to_vmem [thread:$0]  %s1, 256, %s28, [#allocation6], 64, 64, 4
    $region9: #{tpu_custom_call.1} parent=1 // pred_fallthru
      _
    // Predicated region
    $region10: #{tpu_custom_call.1} parent=1 // pred_check
      _
    $region11: #{tpu_custom_call.1} parent=1 // pred_check_branch
      %35 = sbr.rel (0) target = $region13
    $region12: #{tpu_custom_call.1} parent=1 // pred_region
      %36 = dma.done [#allocation3], 128
    $region13: #{tpu_custom_call.1} parent=1 // pred_fallthru
      _
    // Predicated region
    $region14: #{tpu_custom_call.1} parent=1 // pred_check
      _
    $region15: #{tpu_custom_call.1} parent=1 // pred_check_branch
      %38 = sbr.rel (0) target = $region17
    $region16: #{tpu_custom_call.1} parent=1 // pred_region
      %39 = dma.done [#allocation6], 256
    $region17: #{tpu_custom_call.1} parent=1 // pred_fallthru
      _
    %v41 = vld [vmem:[#allocation2] sm:$0xf]
    %v42 = vld [vmem:[#allocation2 + $0x4] sm:$0xf]
    %v43 = vld [vmem:[#allocation5] sm:$0xf]
    %v44 = vld [vmem:[#allocation5 + $0x4] sm:$0xf]
    %v45 = vld [vmem:[#allocation5 + $0x8] sm:$0xf]
    %v46 = vld [vmem:[#allocation5 + $0xc] sm:$0xf]
    %v49 = vunpack.c.l.b16 %v41
    %v50 = vunpack.c.l.b16 %v42
    %v51 = vpack.c.b16 %v50, %v49
    %v56 = vunpack.c.l.b16 %v43
    %v57 = vunpack.c.l.b16 %v44
    %v58 = vunpack.c.l.b16 %v45
    %v59 = vunpack.c.l.b16 %v46
    %v60 = vpack.c.b16 %v57, %v56
    %v61 = vpack.c.b16 %v59, %v58
    %vm64 = vcmask 261120
    %v66 = vsel %vm64, %v51, 0
    %68 = vmatprep.subr.bf16.mxu0 0
    %69 = vmatpush1.bf16.msra.mxu0 %v60
    %70 = vmatprep.subr.bf16.mxu0 0
    %71 = vmatpush1.bf16.msra.mxu0 %v61
    %72 = vmatprep.subr.bf16.mxu0 0
    %73 = vmatpush1.bf16.msra.mxu0 0
    %74 = vmatprep.subr.bf16.mxu0 0
    %75 = vmatpush1.bf16.msra.mxu0 0
    %76 = vmatprep.subr.bf16.mxu0 0
    %77 = vmatpush1.bf16.msra.mxu0 0
    %78 = vmatprep.subr.bf16.mxu0 0
    %79 = vmatpush1.bf16.msra.mxu0 0
    %80 = vmatprep.subr.bf16.mxu0 0
    %81 = vmatpush1.bf16.msra.mxu0 0
    %82 = vmatprep.subr.bf16.mxu0 0
    %83 = vmatpush1.bf16.msra.mxu0 0
    %84 = vmatprep.subr.bf16.mxu0 0
    %85 = vmatpush1.bf16.msra.mxu0 0
    %86 = vmatprep.subr.bf16.mxu0 0
    %87 = vmatpush1.bf16.msra.mxu0 0
    %88 = vmatprep.subr.bf16.mxu0 0
    %89 = vmatpush1.bf16.msra.mxu0 0
    %90 = vmatprep.subr.bf16.mxu0 0
    %91 = vmatpush1.bf16.msra.mxu0 0
    %92 = vmatprep.subr.bf16.mxu0 0
    %93 = vmatpush1.bf16.msra.mxu0 0
    %94 = vmatprep.subr.bf16.mxu0 0
    %95 = vmatpush1.bf16.msra.mxu0 0
    %96 = vmatprep.subr.bf16.mxu0 0
    %97 = vmatpush1.bf16.msra.mxu0 0
    %98 = vmatprep.subr.bf16.mxu0 0
    %99 = vmatpush1.bf16.msra.mxu0 0
    %100 = vmatprep.mubr.bf16.mxu0 0
    %101 = vmatmul.mubr.bf16.gmra.mrb[0].mxu0 %v66
    %v102 = vpop.f32.mrb[0].mxu0
    %v103 = vadd.f32 0.0, %v102
    %v104 = vpop.f32.mrb[0].mxu0
    %v105 = vpop.f32.mrb[0].mxu0
    %v106 = vadd.f32 0.0, %v105
    %v107 = vpop.f32.mrb[0].mxu0
    %108 = vdwg.mxu0
    %v109 = vpack.c.bf16 %v106, %v103
    %v111 = vunpack.c.l.b16 %v109
    %v112 = vunpack.c.h.b16 %v109
    %v113 = vpack.c.b16 %v111, %v111
    %v114 = vpack.c.b16 %v112, %v112
    %vm117 = vcmask 781312
    %118 = vst.msk [vmem:[#allocation7] sm:$0xf] %vm117, %v113
    %119 = vst.msk [vmem:[#allocation7 + $0x4] sm:$0xf] %vm117, %v114
    // Predicated region
    $region18: #{tpu_custom_call.1} parent=1 // pred_check
      _
    $region19: #{tpu_custom_call.1} parent=1 // pred_check_branch
      %121 = sbr.rel (0) target = $region21
    $region20: #{tpu_custom_call.1} parent=1 // pred_region
      %s123 = ssub.s32 128, 128
      %124 = vsyncadd [#allocation4], %s123
      %s125 = sshll.u32 [#allocation7], 4
      %s126 = int_to_ptr.vmem [resolvable:$true] %s125
      %131 = dma.vmem_to_hbm [thread:$0]  %s126, 128, %s2, [#allocation4], 64, 64, 4
    $region21: #{tpu_custom_call.1} parent=1 // pred_fallthru
      _
    // Predicated region
    $region22: #{tpu_custom_call.1} parent=1 // pred_check
      _
    $region23: #{tpu_custom_call.1} parent=1 // pred_check_branch
      %133 = sbr.rel (0) target = $region25
    $region24: #{tpu_custom_call.1} parent=1 // pred_region
      %134 = dma.done [#allocation4], 128
    $region25: #{tpu_custom_call.1} parent=1 // pred_fallthru
      _
    %135 = vsyncpa [#allocation3], 1
    %136 = vsyncpa [#allocation6], 1
    %137 = vsyncpa [#allocation4], 1

</llo_original>
